<compile_context>
chip_gen: v5e
topology: v5e:2x2
jax: 0.10.0
libtpu: 0.0.40
codegen_flags: <defaults>
</compile_context>

<pallas_src>
import functools

import jax
import jax.numpy as jnp
from jax.experimental import pallas as pl
from jax.experimental.pallas import tpu as pltpu


def _concat_dma_kernel(channel_offsets, channel_sizes, *refs):
    """Pure-DMA concat along dim=1 (channels) for NCHW tensors.

    refs = (*input_hbm_refs, out_hbm_ref, dma_sems).
    Each input is copied with one strided HBM->HBM DMA into its statically
    offset channel slice of the output.  All DMAs are started first (they run
    concurrently on the DMA engines), then drained.
    """
    *in_refs, out_ref, sems = refs
    copies = []
    for i, (x_ref, off, c) in enumerate(
            zip(in_refs, channel_offsets, channel_sizes)):
        cp = pltpu.make_async_copy(
            x_ref,                                   # (N, C_i, H, W) in HBM
            out_ref.at[:, pl.ds(off, c), :, :],      # channel slice of output
            sems.at[i])
        cp.start()
        copies.append(cp)
    # All DMAs are in flight; now wait for completion.
    for cp in copies:
        cp.wait()


def concat_nchw(xs, dim: int = 1):
    """Pallas equivalent of torch.cat(xs, dim=1) for NCHW tensors."""
    xs = list(xs)
    assert len(xs) >= 1
    if len(xs) == 1:
        return xs[0]
    assert dim == 1, "This kernel implements the YOLO Concat default (dim=1)."

    n, _, h, w = xs[0].shape
    dt = xs[0].dtype
    for x in xs:
        assert x.ndim == 4
        assert x.shape[0] == n and x.shape[2] == h and x.shape[3] == w
        assert x.dtype == dt

    channels = tuple(int(x.shape[1]) for x in xs)
    offsets = []
    acc = 0
    for c in channels:
        offsets.append(acc)
        acc += c
    c_out = acc

    kernel = functools.partial(_concat_dma_kernel, tuple(offsets), channels)

    # No grid: one strided DMA per input is the minimal descriptor count and
    # gives maximal DMA overlap; nothing is staged through VMEM.
    return pl.pallas_call(
        kernel,
        out_shape=jax.ShapeDtypeStruct((n, c_out, h, w), dt),
        in_specs=[pl.BlockSpec(memory_space=pl.ANY) for _ in xs],
        out_specs=pl.BlockSpec(memory_space=pl.ANY),
        scratch_shapes=[pltpu.SemaphoreType.DMA((len(xs),))],
    )(*xs)


if __name__ == "__main__":
    key = jax.random.PRNGKey(0)
    k1, k2, k3 = jax.random.split(key, 3)

    # Typical YOLO neck concat: feature maps with same N, H, W, different C.
    x1 = jax.random.normal(k1, (2, 4, 16, 16), dtype=jnp.float32)
    x2 = jax.random.normal(k2, (2, 8, 16, 16), dtype=jnp.float32)
    x3 = jax.random.normal(k3, (2, 4, 16, 16), dtype=jnp.float32)

    out = jax.block_until_ready(concat_nchw([x1, x2, x3], dim=1))

    ref = jnp.concatenate([x1, x2, x3], axis=1)
    assert out.shape == (2, 16, 16, 16), out.shape
    assert out.dtype == x1.dtype
    assert jnp.array_equal(out, ref), "Pallas concat mismatch vs jnp.concatenate"

    print("KERNEL_OK")
</pallas_src>

<mosaic_0001>
module attributes {stable_mosaic.version = 11 : i64} {
  func.func @_concat_dma_kernel(%arg0: memref<2x4x16x16xf32, #tpu.memory_space<any>>, %arg1: memref<2x8x16x16xf32, #tpu.memory_space<any>>, %arg2: memref<2x4x16x16xf32, #tpu.memory_space<any>>, %arg3: memref<2x16x16x16xf32, #tpu.memory_space<any>>, %arg4: memref<3x!tpu.dma_semaphore, #tpu.memory_space<semaphore_mem>>) attributes {dimension_semantics = [], scalar_prefetch = 0 : i64, scratch_operands = 1 : i64, tpu.core_type = #tpu.core_type<tc>} {
    %c0_i32 = arith.constant 0 : i32
    %c0_i32_0 = arith.constant 0 : i32
    %c0_i32_1 = arith.constant 0 : i32
    %c0_i32_2 = arith.constant 0 : i32
    %c0_i32_3 = arith.constant 0 : i32
    %0 = tpu.memref_slice %arg3[%c0_i32_0, %c0_i32_1, %c0_i32_2, %c0_i32_3] : memref<2x16x16x16xf32, #tpu.memory_space<any>> -> memref<2x4x16x16xf32, #tpu.memory_space<any>>
    %1 = tpu.memref_slice %arg4[%c0_i32] : memref<3x!tpu.dma_semaphore, #tpu.memory_space<semaphore_mem>> -> memref<1x!tpu.dma_semaphore, #tpu.memory_space<semaphore_mem>>
    %2 = tpu.memref_squeeze %1 : memref<1x!tpu.dma_semaphore, #tpu.memory_space<semaphore_mem>> -> memref<!tpu.dma_semaphore, #tpu.memory_space<semaphore_mem>>
    tpu.enqueue_dma source(%arg0 : memref<2x4x16x16xf32, #tpu.memory_space<any>>) target(%0 : memref<2x4x16x16xf32, #tpu.memory_space<any>>) target_semaphore(%2 : memref<!tpu.dma_semaphore, #tpu.memory_space<semaphore_mem>>)
    %c1_i32 = arith.constant 1 : i32
    %c0_i32_4 = arith.constant 0 : i32
    %c4_i32 = arith.constant 4 : i32
    %c0_i32_5 = arith.constant 0 : i32
    %c0_i32_6 = arith.constant 0 : i32
    %3 = tpu.memref_slice %arg3[%c0_i32_4, %c4_i32, %c0_i32_5, %c0_i32_6] : memref<2x16x16x16xf32, #tpu.memory_space<any>> -> memref<2x8x16x16xf32, #tpu.memory_space<any>>
    %4 = tpu.memref_slice %arg4[%c1_i32] : memref<3x!tpu.dma_semaphore, #tpu.memory_space<semaphore_mem>> -> memref<1x!tpu.dma_semaphore, #tpu.memory_space<semaphore_mem>>
    %5 = tpu.memref_squeeze %4 : memref<1x!tpu.dma_semaphore, #tpu.memory_space<semaphore_mem>> -> memref<!tpu.dma_semaphore, #tpu.memory_space<semaphore_mem>>
    tpu.enqueue_dma source(%arg1 : memref<2x8x16x16xf32, #tpu.memory_space<any>>) target(%3 : memref<2x8x16x16xf32, #tpu.memory_space<any>>) target_semaphore(%5 : memref<!tpu.dma_semaphore, #tpu.memory_space<semaphore_mem>>)
    %c2_i32 = arith.constant 2 : i32
    %c0_i32_7 = arith.constant 0 : i32
    %c12_i32 = arith.constant 12 : i32
    %c0_i32_8 = arith.constant 0 : i32
    %c0_i32_9 = arith.constant 0 : i32
    %6 = tpu.memref_slice %arg3[%c0_i32_7, %c12_i32, %c0_i32_8, %c0_i32_9] : memref<2x16x16x16xf32, #tpu.memory_space<any>> -> memref<2x4x16x16xf32, #tpu.memory_space<any>>
    %7 = tpu.memref_slice %arg4[%c2_i32] : memref<3x!tpu.dma_semaphore, #tpu.memory_space<semaphore_mem>> -> memref<1x!tpu.dma_semaphore, #tpu.memory_space<semaphore_mem>>
    %8 = tpu.memref_squeeze %7 : memref<1x!tpu.dma_semaphore, #tpu.memory_space<semaphore_mem>> -> memref<!tpu.dma_semaphore, #tpu.memory_space<semaphore_mem>>
    tpu.enqueue_dma source(%arg2 : memref<2x4x16x16xf32, #tpu.memory_space<any>>) target(%6 : memref<2x4x16x16xf32, #tpu.memory_space<any>>) target_semaphore(%8 : memref<!tpu.dma_semaphore, #tpu.memory_space<semaphore_mem>>)
    %c0_i32_10 = arith.constant 0 : i32
    %c0_i32_11 = arith.constant 0 : i32
    %c0_i32_12 = arith.constant 0 : i32
    %c0_i32_13 = arith.constant 0 : i32
    %c0_i32_14 = arith.constant 0 : i32
    %9 = tpu.memref_slice %arg3[%c0_i32_11, %c0_i32_12, %c0_i32_13, %c0_i32_14] : memref<2x16x16x16xf32, #tpu.memory_space<any>> -> memref<2x4x16x16xf32, #tpu.memory_space<any>>
    %10 = tpu.memref_slice %arg4[%c0_i32_10] : memref<3x!tpu.dma_semaphore, #tpu.memory_space<semaphore_mem>> -> memref<1x!tpu.dma_semaphore, #tpu.memory_space<semaphore_mem>>
    %11 = tpu.memref_squeeze %10 : memref<1x!tpu.dma_semaphore, #tpu.memory_space<semaphore_mem>> -> memref<!tpu.dma_semaphore, #tpu.memory_space<semaphore_mem>>
    tpu.wait_dma2 semaphore(%11 : memref<!tpu.dma_semaphore, #tpu.memory_space<semaphore_mem>>) src(%arg0 : memref<2x4x16x16xf32, #tpu.memory_space<any>>) dst(%9 : memref<2x4x16x16xf32, #tpu.memory_space<any>>)
    %c1_i32_15 = arith.constant 1 : i32
    %c0_i32_16 = arith.constant 0 : i32
    %c4_i32_17 = arith.constant 4 : i32
    %c0_i32_18 = arith.constant 0 : i32
    %c0_i32_19 = arith.constant 0 : i32
    %12 = tpu.memref_slice %arg3[%c0_i32_16, %c4_i32_17, %c0_i32_18, %c0_i32_19] : memref<2x16x16x16xf32, #tpu.memory_space<any>> -> memref<2x8x16x16xf32, #tpu.memory_space<any>>
    %13 = tpu.memref_slice %arg4[%c1_i32_15] : memref<3x!tpu.dma_semaphore, #tpu.memory_space<semaphore_mem>> -> memref<1x!tpu.dma_semaphore, #tpu.memory_space<semaphore_mem>>
    %14 = tpu.memref_squeeze %13 : memref<1x!tpu.dma_semaphore, #tpu.memory_space<semaphore_mem>> -> memref<!tpu.dma_semaphore, #tpu.memory_space<semaphore_mem>>
    tpu.wait_dma2 semaphore(%14 : memref<!tpu.dma_semaphore, #tpu.memory_space<semaphore_mem>>) src(%arg1 : memref<2x8x16x16xf32, #tpu.memory_space<any>>) dst(%12 : memref<2x8x16x16xf32, #tpu.memory_space<any>>)
    %c2_i32_20 = arith.constant 2 : i32
    %c0_i32_21 = arith.constant 0 : i32
    %c12_i32_22 = arith.constant 12 : i32
    %c0_i32_23 = arith.constant 0 : i32
    %c0_i32_24 = arith.constant 0 : i32
    %15 = tpu.memref_slice %arg3[%c0_i32_21, %c12_i32_22, %c0_i32_23, %c0_i32_24] : memref<2x16x16x16xf32, #tpu.memory_space<any>> -> memref<2x4x16x16xf32, #tpu.memory_space<any>>
    %16 = tpu.memref_slice %arg4[%c2_i32_20] : memref<3x!tpu.dma_semaphore, #tpu.memory_space<semaphore_mem>> -> memref<1x!tpu.dma_semaphore, #tpu.memory_space<semaphore_mem>>
    %17 = tpu.memref_squeeze %16 : memref<1x!tpu.dma_semaphore, #tpu.memory_space<semaphore_mem>> -> memref<!tpu.dma_semaphore, #tpu.memory_space<semaphore_mem>>
    tpu.wait_dma2 semaphore(%17 : memref<!tpu.dma_semaphore, #tpu.memory_space<semaphore_mem>>) src(%arg2 : memref<2x4x16x16xf32, #tpu.memory_space<any>>) dst(%15 : memref<2x4x16x16xf32, #tpu.memory_space<any>>)
    return
  }
}

</mosaic_0001>

<llo_original>
// kernel: tpu_custom_call.1
$region0: #{tpu_custom_call.1}
  #allocation0 [shape = 'u32[]', space=smem, size = 0x4, offset = 0x4, fixed_abs, tag = 'smem constant byte address 0x4 - core index']
  #allocation1 [shape = 'u32[72,128]{1,0:T(1,128)}', space=vmem, size = 0x9000, scoped, tag = 'internal scratch']
  #allocation2 [shape = 's32[3]{0}', space=sflag, size = 0xc, scoped, tag = 'scratch operand']
  #allocation3 [shape = 's32[]', space=sflag, size = 0x4, offset = 0, fixed_abs, tag = 'sflag constant byte address 0x0 - dummy sync flag']
  #allocation5 [shape = 's32[]', space=sflag, size = 0x4, offset = 0, fixed_abs, tag = 'sflag constant byte address 0x0 - dummy sync flag']
  #allocation7 [shape = 's32[]', space=sflag, size = 0x4, offset = 0, fixed_abs, tag = 'sflag constant byte address 0x0 - dummy sync flag']
  %s0 = inlined_call_operand.hbm [shape: f32[2,4,16,16], index: 0, kind: input, shape index: {}]
  %s1 = inlined_call_operand.hbm [shape: f32[2,8,16,16], index: 1, kind: input, shape index: {}]
  %s2 = inlined_call_operand.hbm [shape: f32[2,4,16,16], index: 2, kind: input, shape index: {}]
  %s3 = inlined_call_operand.hbm [shape: f32[2,16,16,16], index: 3, kind: output, shape index: {}]
  %s4 = sld [smem:[#allocation0]]
  $region2: #{tpu_custom_call.1} parent=0
    _
  %s6 = ssub.s32 1, %s4
  %s7 = scalar_select 0, %s6, %s4
  $region1: #{tpu_custom_call.1} parent=0
    #allocation4 [shape = 'u32[3]{0}', space=smem, size = 0xc, scoped, tag = 'DMA stride descriptor']
    #allocation6 [shape = 'u32[3]{0}', space=smem, size = 0xc, scoped, tag = 'DMA stride descriptor']
    #allocation8 [shape = 'u32[3]{0}', space=smem, size = 0xc, scoped, tag = 'DMA stride descriptor']
    %s9 = sshll.u32 1, 14
    %s10 = sxor.u32 4294967295, %s9
    %s12 = sshll.u32 %s0, 4
    %s13 = int_to_ptr.hbm [resolvable:$true] %s12
    %s14 = sshll.u32 %s3, 4
    %s15 = int_to_ptr.hbm [resolvable:$true] %s14
    %19 = sst [smem:[#allocation4]] 1024
    %s20 = scalar_lea.smem [#allocation4], 1
    %21 = sst [smem:[%s20]] 4096
    %s22 = scalar_lea.smem [#allocation4], 2
    %23 = sst [smem:[%s22]] 64
    %25 = dma.general %s13, 2048, %s15, [#allocation2], [#allocation3], [#allocation4], 0, 0
    %s26 = scalar_lea.hbm %s3, 64
    %s27 = scalar_lea.sflag [#allocation2], 1
    %s29 = sshll.u32 1, 14
    %s30 = sxor.u32 4294967295, %s29
    %s32 = sshll.u32 %s1, 4
    %s33 = int_to_ptr.hbm [resolvable:$true] %s32
    %s34 = sshll.u32 %s26, 4
    %s35 = int_to_ptr.hbm [resolvable:$true] %s34
    %39 = sst [smem:[#allocation6]] 2048
    %s40 = scalar_lea.smem [#allocation6], 1
    %41 = sst [smem:[%s40]] 4096
    %s42 = scalar_lea.smem [#allocation6], 2
    %43 = sst [smem:[%s42]] 128
    %45 = dma.general %s33, 4096, %s35, %s27, [#allocation5], [#allocation6], 0, 0
    %s46 = scalar_lea.hbm %s3, 192
    %s47 = scalar_lea.sflag [#allocation2], 2
    %s49 = sshll.u32 1, 14
    %s50 = sxor.u32 4294967295, %s49
    %s52 = sshll.u32 %s2, 4
    %s53 = int_to_ptr.hbm [resolvable:$true] %s52
    %s54 = sshll.u32 %s46, 4
    %s55 = int_to_ptr.hbm [resolvable:$true] %s54
    %59 = sst [smem:[#allocation8]] 1024
    %s60 = scalar_lea.smem [#allocation8], 1
    %61 = sst [smem:[%s60]] 4096
    %s62 = scalar_lea.smem [#allocation8], 2
    %63 = sst [smem:[%s62]] 64
    %65 = dma.general %s53, 2048, %s55, %s47, [#allocation7], [#allocation8], 0, 0
    %s66 = smul.u32 2, 4
    %s67 = smul.u32 %s66, 16
    %s68 = smul.u32 %s67, 1
    %s69 = sshll.u32 %s68, 4
    %70 = dma.done [#allocation2], %s69
    %s71 = smul.u32 2, 8
    %s72 = smul.u32 %s71, 16
    %s73 = smul.u32 %s72, 1
    %s74 = sshll.u32 %s73, 4
    %75 = dma.done %s27, %s74
    %s76 = sshll.u32 %s68, 4
    %77 = dma.done %s47, %s76
  %78 = vsyncmov [#allocation2]
  %s79 = vpop.sfrf %78
  %p80 = scmp.eq.s32.totalorder %s79, 0
  %p81 = pneg %p80
  %83 = shalt.err (%p81)
  %s84 = scalar_lea.sflag [#allocation2], 1
  %85 = vsyncmov %s84
  %s86 = vpop.sfrf %85
  %p87 = scmp.eq.s32.totalorder %s86, 0
  %p88 = pneg %p87
  %90 = shalt.err (%p88)
  %s91 = scalar_lea.sflag [#allocation2], 2
  %92 = vsyncmov %s91
  %s93 = vpop.sfrf %92
  %p94 = scmp.eq.s32.totalorder %s93, 0
  %p95 = pneg %p94
  %97 = shalt.err (%p95)

</llo_original>
